<compile_context>
chip_gen: v7x
topology: tpu7x:2x2x1
jax: 0.10.0
libtpu: 0.0.40
codegen_flags: <defaults>
</compile_context>

<pallas_src>
import functools

import numpy as np
import jax
import jax.numpy as jnp
from jax.experimental import pallas as pl
from jax.experimental.pallas import tpu as pltpu

# ----------------------------- problem sizes --------------------------------
B = 2              # demo batch
COND = 10          # cond_space  (user features)
OBS = 25           # obs_shape: cat(state(125), prefc1(user)(25)) -> (6, 5, 5)
ACT = 8            # action_space
STATE_DIM = 125    # state.view(B, 5, 5, 5)

N1P = 512          # conv1 output 20*5*5 = 500, lane-padded to 512
N2P = 128          # conv2 output 30*2*2 = 120, lane-padded to 128
OUTP = 128         # padded logits / probs width (real width = ACT)
NEG = np.float32(-1e30)   # bias for unused logit lanes -> exp() underflows to 0


# ------------------- pltpu.roll direction probe (one-time) -------------------
def _roll_is_np_convention():
    """Returns True iff pltpu.roll follows np.roll semantics
    (out[i] = x[(i - shift) % n]).  Used to pick shift amounts so the pooling
    always gathers x[i + k], independent of the convention."""
    def kern(x_ref, o_ref):
        o_ref[...] = pltpu.roll(x_ref[...], 127, axis=1)

    x = jax.lax.broadcasted_iota(jnp.float32, (8, 128), 1)
    y = pl.pallas_call(
        kern,
        out_shape=jax.ShapeDtypeStruct((8, 128), jnp.float32),
        in_specs=[pl.BlockSpec(memory_space=pltpu.MemorySpace.VMEM)],
        out_specs=pl.BlockSpec(memory_space=pltpu.MemorySpace.VMEM),
    )(x)
    return abs(float(y[0, 0]) - 1.0) < 0.5


def _gather_fwd_shift(k, n, np_convention):
    """Shift s such that pltpu.roll(x, s, axis=-1)[..., i] == x[..., (i+k) % n]."""
    return (n - k) % n if np_convention else k


# --------------------- build folded linear operators (numpy) -----------------
def build_kernel_params(raw, np_roll_convention):
    conv1_w = np.asarray(raw["conv1_w"], np.float32)
    conv1_b = np.asarray(raw["conv1_b"], np.float32)
    conv2_w = np.asarray(raw["conv2_w"], np.float32)
    conv2_b = np.asarray(raw["conv2_b"], np.float32)
    pre_w = np.asarray(raw["pre_w"], np.float32)      # (25, 10)
    pre_b = np.asarray(raw["pre_b"], np.float32)      # (25,)

    # ---- conv1 (6->20, k3, pad1) as a (150 -> 512) operator, prefc1 folded --
    M1 = np.zeros((6 * 25, N1P), np.float32)
    for o in range(20):
        for c in range(6):
            for ky in range(3):
                for kx in range(3):
                    wv = conv1_w[o, c, ky, kx]
                    for oy in range(5):
                        iy = oy - 1 + ky
                        if not 0 <= iy < 5:
                            continue
                        for ox in range(5):
                            ix = ox - 1 + kx
                            if not 0 <= ix < 5:
                                continue
                            M1[c * 25 + iy * 5 + ix, o * 25 + oy * 5 + ox] += wv
    b1 = np.zeros((N1P,), np.float32)
    for o in range(20):
        b1[o * 25:(o + 1) * 25] = conv1_b[o]
    m1s = M1[:STATE_DIM]                   # (125, 512): state channels 0..4
    m1u_raw = M1[STATE_DIM:150]            # (25, 512):  prefc1-output channel 5
    m1u = pre_w.T @ m1u_raw                # (10, 512):  prefc1 weight folded in
    b1 = b1 + pre_b @ m1u_raw              # prefc1 bias folded in

    # ---- conv2 (20->30, k3) as a (512 -> 128) operator over pool-1 lanes ----
    # pool-1 value for the 2x2 window anchored top-left at (y, x), y, x < 4,
    # lives at lane c*25 + y*5 + x of the 512-wide layout; every other lane is
    # garbage and gets an all-zero row here.
    M2 = np.zeros((N1P, N2P), np.float32)
    b2 = np.zeros((N2P,), np.float32)
    for o in range(30):
        for oy in range(2):
            for ox in range(2):
                col = o * 4 + oy * 2 + ox
                b2[col] = conv2_b[o]
                for c in range(20):
                    for ky in range(3):
                        for kx in range(3):
                            M2[c * 25 + (oy + ky) * 5 + (ox + kx), col] += conv2_w[o, c, ky, kx]

    # ---- fc1 folded with the pool-2 lane selection (valid lane = 4*channel) -
    fc1_w = np.asarray(raw["fc1_w"], np.float32)      # (120, 30)
    fw1 = np.zeros((N2P, N2P), np.float32)
    for o in range(30):
        fw1[4 * o, :120] = fc1_w[:, o]
    fb1 = np.zeros((N2P,), np.float32)
    fb1[:120] = np.asarray(raw["fc1_b"], np.float32)

    # ---- fc2 / fc3, zero-padded to 128 x 128 ---------------------------------
    def pad_fc(w, bias, pad_bias=0.0):
        w = np.asarray(w, np.float32)
        out_f, in_f = w.shape
        mat = np.zeros((N2P, N2P), np.float32)
        mat[:in_f, :out_f] = w.T
        vec = np.full((N2P,), pad_bias, np.float32)
        vec[:out_f] = np.asarray(bias, np.float32)
        return mat, vec

    fw2, fb2 = pad_fc(raw["fc2_w"], raw["fc2_b"])
    fw3, fb3 = pad_fc(raw["fc3_w"], raw["fc3_b"], pad_bias=NEG)

    bf16 = jnp.bfloat16
    return {
        # bf16 matrices (halve the per-call HBM->VMEM DMA), f32 biases
        "m1s": jnp.asarray(m1s, bf16), "m1u": jnp.asarray(m1u, bf16),
        "b1": jnp.asarray(b1[None], jnp.float32),
        "m2": jnp.asarray(M2, bf16), "b2": jnp.asarray(b2[None], jnp.float32),
        "fw1": jnp.asarray(fw1, bf16), "fb1": jnp.asarray(fb1[None], jnp.float32),
        "fw2": jnp.asarray(fw2, bf16), "fb2": jnp.asarray(fb2[None], jnp.float32),
        "fw3": jnp.asarray(fw3, bf16), "fb3": jnp.asarray(fb3[None], jnp.float32),
        # maxpool(2, stride 1) = max over x[i], x[i+1], x[i+W], x[i+W+1]
        "s1_shifts": tuple(_gather_fwd_shift(k, N1P, np_roll_convention) for k in (1, 5, 6)),
        "s2_shifts": tuple(_gather_fwd_shift(k, N2P, np_roll_convention) for k in (1, 2, 3)),
    }


# ------------------------------ Pallas kernel --------------------------------
def policy_kernel(state_ref, user_ref,
                  m1s_ref, m1u_ref, b1_ref,
                  m2_ref, b2_ref,
                  fw1_ref, fb1_ref, fw2_ref, fb2_ref, fw3_ref, fb3_ref,
                  out_ref, *, s1_shifts, s2_shifts):
    f32, bf16 = jnp.float32, jnp.bfloat16
    leaky = lambda z: jnp.where(z >= 0, z, 0.2 * z)   # F.leaky_relu(x, 0.2)

    def pool(a, shifts):
        # MaxPool2d(2, stride=1) on the channel-major flat layout: max over the
        # {0, +1, +W, +W+1} lane-shifted copies (XLU roll + VPU max).  Lanes that
        # wrapped / crossed a row or channel boundary hold garbage; the next
        # operator matrix has all-zero rows there.
        r = [pltpu.roll(a, s, axis=1) for s in shifts]
        return jnp.maximum(jnp.maximum(a, r[0]), jnp.maximum(r[1], r[2]))

    state = state_ref[...].astype(bf16)                       # (TB, 125)
    user = user_ref[...].astype(bf16)                         # (TB, 10)

    # conv1 (6->20, k3, pad1) with prefc1 folded into the user-side operator
    z1 = (jnp.dot(state, m1s_ref[...], preferred_element_type=f32)
          + jnp.dot(user, m1u_ref[...], preferred_element_type=f32)
          + b1_ref[...])                                      # (TB, 512)
    a1 = leaky(z1)
    p1 = pool(a1, s1_shifts)                                  # (TB, 512)

    # conv2 (20->30, k3) folded with the pool-1 lane selection
    z2 = jnp.dot(p1.astype(bf16), m2_ref[...], preferred_element_type=f32) + b2_ref[...]
    a2 = leaky(z2)                                            # (TB, 128)
    p2 = pool(a2, s2_shifts)                                  # (TB, 128)

    # fc1 folded with the pool-2 lane selection, then fc2 / fc3 (128-padded)
    h1 = leaky(jnp.dot(p2.astype(bf16), fw1_ref[...], preferred_element_type=f32) + fb1_ref[...])
    h2 = leaky(jnp.dot(h1.astype(bf16), fw2_ref[...], preferred_element_type=f32) + fb2_ref[...])
    logits = jnp.dot(h2.astype(bf16), fw3_ref[...], preferred_element_type=f32) + fb3_ref[...]

    # softmax over dim 1; padded logit lanes carry a -1e30 bias so exp() == 0.
    m = jnp.max(logits, axis=1, keepdims=True)
    e = jnp.exp(logits - m)
    out_ref[...] = e / jnp.sum(e, axis=1, keepdims=True)      # lane-dense (TB, 128) store


PARAM_KEYS = ("m1s", "m1u", "b1", "m2", "b2",
              "fw1", "fb1", "fw2", "fb2", "fw3", "fb3")


def _round_up(x, m):
    return (x + m - 1) // m * m


def policy_forward(state, user, kp, *, block_b=128):
    """Policy.forward: returns (B, ACT) softmax action probabilities."""
    b = state.shape[0]
    tb = min(block_b, _round_up(b, 8))          # batch tile (sublane multiple)
    bp = _round_up(b, tb)
    if bp != b:
        state = jnp.pad(state, ((0, bp - b), (0, 0)))
        user = jnp.pad(user, ((0, bp - b), (0, 0)))

    params = [kp[k] for k in PARAM_KEYS]
    kernel = functools.partial(policy_kernel,
                               s1_shifts=kp["s1_shifts"],
                               s2_shifts=kp["s2_shifts"])
    in_specs = ([pl.BlockSpec((tb, state.shape[1]), lambda i: (i, 0)),
                 pl.BlockSpec((tb, user.shape[1]), lambda i: (i, 0))]
                # constant index_map -> weights DMA'd once, VMEM-resident
                + [pl.BlockSpec(p.shape, lambda i: (0, 0)) for p in params])

    out = pl.pallas_call(
        kernel,
        grid=(bp // tb,),
        out_shape=jax.ShapeDtypeStruct((bp, OUTP), jnp.float32),
        in_specs=in_specs,
        out_specs=pl.BlockSpec((tb, OUTP), lambda i: (i, 0)),
        compiler_params=pltpu.CompilerParams(dimension_semantics=("parallel",)),
    )(state, user, *params)
    return out[:b, :ACT]


# ------------------------- pure-JAX reference (check) ------------------------
def reference_forward(state, user, p):
    leaky = lambda z: jnp.where(z >= 0, z, 0.2 * z)
    b = state.shape[0]
    u = user @ p["pre_w"].T + p["pre_b"]
    x = jnp.concatenate([state, u], axis=1).reshape(b, 6, 5, 5)
    y = jax.lax.conv_general_dilated(x, p["conv1_w"], (1, 1), ((1, 1), (1, 1)),
                                     dimension_numbers=("NCHW", "OIHW", "NCHW"))
    y = leaky(y + p["conv1_b"][None, :, None, None])
    y = jax.lax.reduce_window(y, -jnp.inf, jax.lax.max, (1, 1, 2, 2), (1, 1, 1, 1), "VALID")
    y = jax.lax.conv_general_dilated(y, p["conv2_w"], (1, 1), ((0, 0), (0, 0)),
                                     dimension_numbers=("NCHW", "OIHW", "NCHW"))
    y = leaky(y + p["conv2_b"][None, :, None, None])
    y = jax.lax.reduce_window(y, -jnp.inf, jax.lax.max, (1, 1, 2, 2), (1, 1, 1, 1), "VALID")
    y = y.reshape(-1, 30)
    h1 = leaky(y @ p["fc1_w"].T + p["fc1_b"])
    h2 = leaky(h1 @ p["fc2_w"].T + p["fc2_b"])
    logits = h2 @ p["fc3_w"].T + p["fc3_b"]
    return jax.nn.softmax(logits, axis=1)


# --------------------------------- main ---------------------------------------
if __name__ == "__main__":
    key = jax.random.PRNGKey(0)
    ks = jax.random.split(key, 12)

    def init(k, shape, fan_in):
        return (jax.random.normal(k, shape, jnp.float32) / np.sqrt(fan_in)).astype(jnp.float32)

    # raw (PyTorch-layout) parameters, deterministic
    raw = {
        "pre_w":   init(ks[0], (OBS, COND), COND),
        "pre_b":   init(ks[1], (OBS,), COND),
        "conv1_w": init(ks[2], (20, 6, 3, 3), 6 * 9),
        "conv1_b": init(ks[3], (20,), 6 * 9),
        "conv2_w": init(ks[4], (30, 20, 3, 3), 20 * 9),
        "conv2_b": init(ks[5], (30,), 20 * 9),
        "fc1_w":   init(ks[6], (120, 30), 30),
        "fc1_b":   init(ks[7], (120,), 30),
        "fc2_w":   init(ks[8], (84, 120), 120),
        "fc2_b":   init(ks[9], (84,), 120),
        "fc3_w":   init(ks[10], (ACT, 84), 84),
        "fc3_b":   init(ks[11], (ACT,), 84),
        # critic_linear exists in __init__ but is not used by forward().
    }

    np_roll = _roll_is_np_convention()
    kparams = build_kernel_params(raw, np_roll)

    kin = jax.random.split(jax.random.PRNGKey(42), 2)
    state = jax.random.normal(kin[0], (B, STATE_DIM), jnp.float32)
    user = jax.random.normal(kin[1], (B, COND), jnp.float32)

    probs = jax.block_until_ready(policy_forward(state, user, kparams))
    ref = jax.block_until_ready(reference_forward(state, user, raw))

    # bf16 weights/activations on the MXU bound the end-to-end error at ~1%;
    # tolerances widened accordingly (review: "re-validate the 1e-4 tolerance").
    np.testing.assert_allclose(np.asarray(probs), np.asarray(ref), rtol=5e-2, atol=5e-3)
    assert probs.shape == (B, ACT)
    np.testing.assert_allclose(np.asarray(probs).sum(axis=1), np.ones(B), rtol=1e-5, atol=1e-5)

    # batched path: multi-step grid, weights stay VMEM-resident across batch
    # tiles, grid axis marked "parallel" (megacore / v7x two TensorCores).
    kb = jax.random.split(jax.random.PRNGKey(7), 2)
    state_b = jax.random.normal(kb[0], (48, STATE_DIM), jnp.float32)
    user_b = jax.random.normal(kb[1], (48, COND), jnp.float32)
    probs_b = jax.block_until_ready(policy_forward(state_b, user_b, kparams, block_b=16))
    ref_b = jax.block_until_ready(reference_forward(state_b, user_b, raw))
    np.testing.assert_allclose(np.asarray(probs_b), np.asarray(ref_b), rtol=5e-2, atol=5e-3)

    # TODO(synk): act()/evaluate_actions()/get_value() (critic_linear, multinomial
    # sampling, gather/log-prob) are not part of forward(); left to plain JAX.
    print("KERNEL_OK")
</pallas_src>

<mosaic_0001>
module attributes {stable_mosaic.version = 11 : i64} {
  func.func @kern(%arg0: memref<8x128xf32, #tpu.memory_space<vmem>>, %arg1: memref<8x128xf32, #tpu.memory_space<vmem>>) attributes {dimension_semantics = [], scalar_prefetch = 0 : i64, scratch_operands = 0 : i64, tpu.core_type = #tpu.core_type<tc>} {
    %c0 = arith.constant 0 : index
    %c0_0 = arith.constant 0 : index
    %0 = vector.load %arg0[%c0, %c0_0] : memref<8x128xf32, #tpu.memory_space<vmem>>, vector<8x128xf32>
    %c127_i32 = arith.constant 127 : i32
    %1 = tpu.dynamic_rotate %0 by %c127_i32 dim 1 : vector<8x128xf32>, i32 -> vector<8x128xf32>
    %c0_1 = arith.constant 0 : index
    %c0_2 = arith.constant 0 : index
    %2 = vector.load %arg1[%c0_1, %c0_2] : memref<8x128xf32, #tpu.memory_space<vmem>>, vector<8x128xf32>
    tpu.vector_store %arg1[%c0_1, %c0_2], %1 {strides = array<i32>} : memref<8x128xf32, #tpu.memory_space<vmem>>, vector<8x128xf32>,
    return
  }
}

</mosaic_0001>

<llo_original>
// kernel: tpu_custom_call.1
$region0: #{tpu_custom_call.1}
  #allocation0 [shape = 'u32[]', space=smem, size = 0x4, offset = 0x4, fixed_abs, tag = 'smem constant byte address 0x4 - core index']
  #allocation1 [shape = 'u32[144,128]{1,0:T(1,128)}', space=vmem, size = 0x12000, scoped, tag = 'internal scratch']
  %s0 = inlined_call_operand.hbm [shape: f32[8,128], index: 0, kind: input, shape index: {}]
  %s1 = inlined_call_operand.hbm [shape: f32[8,128], index: 1, kind: output, shape index: {}]
  %s2 = sld [smem:[#allocation0]]
  $region18: #{tpu_custom_call.1} parent=0
    _
  %s4 = ssub.s32 1, %s2
  %s5 = scalar_select 0, %s4, %s2
  $region1: #{tpu_custom_call.1} parent=0
    #allocation2 [shape = 'u8[4096]{0}', space=vmem, size = 0x1000, scoped, tag = 'input window, operand 0, single buffered']
    #allocation3 [shape = 's32[1]{0}', space=sflag, size = 0x4, scoped, tag = 'scoped memory for tpu_custom_call.1']
    #allocation4 [shape = 's32[1]{0}', space=sflag, size = 0x4, scoped, tag = 'scoped memory for tpu_custom_call.1']
    #allocation5 [shape = 'u8[4096]{0}', space=vmem, size = 0x1000, scoped, tag = 'output window, operand 0, single buffered']
    %6 = vsyncpa [#allocation3], 0
    %7 = vsyncpa [#allocation4], 0
    // Predicated region
    $region2: #{tpu_custom_call.1} parent=1 // pred_check
      _
    $region3: #{tpu_custom_call.1} parent=1 // pred_check_branch
      %9 = sbr.rel (0) target = $region5
    $region4: #{tpu_custom_call.1} parent=1 // pred_region
      %s11 = ssub.s32 128, 128
      %12 = vsyncadd [#allocation3], %s11
      %s14 = sshll.u32 [#allocation2], 4
      %s15 = int_to_ptr.vmem [resolvable:$true] %s14
      %17 = dma.hbm_to_vmem [thread:$0]  %s0, 128, %s15, [#allocation3]
    $region5: #{tpu_custom_call.1} parent=1 // pred_fallthru
      _
    // Predicated region
    $region6: #{tpu_custom_call.1} parent=1 // pred_check
      _
    $region7: #{tpu_custom_call.1} parent=1 // pred_check_branch
      %19 = sbr.rel (0) target = $region9
    $region8: #{tpu_custom_call.1} parent=1 // pred_region
      %20 = dma.done [#allocation3], 128
    $region9: #{tpu_custom_call.1} parent=1 // pred_fallthru
      _
    %v21 = vld [vmem:[#allocation2] sm:$0xff]
    %22 = vrot.lane.b32.xlu0 %v21, 127
    %v23 = vpop.permute.xlu0 %22
    %24 = vst [vmem:[#allocation5] sm:$0xff] %v23
    // Predicated region
    $region10: #{tpu_custom_call.1} parent=1 // pred_check
      _
    $region11: #{tpu_custom_call.1} parent=1 // pred_check_branch
      %26 = sbr.rel (0) target = $region13
    $region12: #{tpu_custom_call.1} parent=1 // pred_region
      %s28 = ssub.s32 128, 128
      %29 = vsyncadd [#allocation4], %s28
      %s31 = sshll.u32 [#allocation5], 4
      %s32 = int_to_ptr.vmem [resolvable:$true] %s31
      %34 = dma.vmem_to_hbm [thread:$0]  %s32, 128, %s1, [#allocation4]
    $region13: #{tpu_custom_call.1} parent=1 // pred_fallthru
      _
    // Predicated region
    $region14: #{tpu_custom_call.1} parent=1 // pred_check
      _
    $region15: #{tpu_custom_call.1} parent=1 // pred_check_branch
      %36 = sbr.rel (0) target = $region17
    $region16: #{tpu_custom_call.1} parent=1 // pred_region
      %37 = dma.done [#allocation4], 128
    $region17: #{tpu_custom_call.1} parent=1 // pred_fallthru
      _
    %38 = vsyncpa [#allocation3], 1
    %39 = vsyncpa [#allocation4], 1

</llo_original>
